<compile_context>
chip_gen: v7x
topology: tpu7x:2x2x1
jax: 0.10.0
libtpu: 0.0.40
codegen_flags: <defaults>
</compile_context>

<pallas_src>
import functools

import jax
import jax.numpy as jnp
from jax import lax
from jax.experimental import pallas as pl
from jax.experimental.pallas import tpu as pltpu


_SUB = 8           # timesteps per register-tile output block
_VMEM_LIMIT = 32 * 1024 * 1024
_VMEM_BUDGET = 24 * 1024 * 1024


def _round_up(x, m):
    return (x + m - 1) // m * m


# --------------------------------------------------------------------------
# Phase 1: input-side gate projection (parallel over sequence chunks)
# --------------------------------------------------------------------------
def _input_proj_kernel(inp_ref, w_ref, b_ref, out_ref):
    # (chunk, F) @ (F, G) + (1, G)  -> (chunk, G)
    out_ref[...] = (
        jnp.dot(inp_ref[...], w_ref[...], preferred_element_type=jnp.float32)
        + b_ref[...]
    )


# --------------------------------------------------------------------------
# Phase 2: sequential GRU recurrence (serial over sequence chunks)
# --------------------------------------------------------------------------
def _gru_recurrence_kernel(
    gates_ref,   # (chunk, G)  precomputed input-side gate activations
    whh_ref,     # (h_w, G)    W_hh^T in the chosen gate layout
    bhh_ref,     # (1, G)
    out_ref,     # (chunk, h_w) GRU outputs for this chunk
    h_ref,       # scratch (1, h_w): hidden state carried across chunks
    *,
    h_w: int,
    chunk: int,
):
    # h0 = zeros (PyTorch default) only at the first chunk.
    @pl.when(pl.program_id(0) == 0)
    def _():
        h_ref[...] = jnp.zeros_like(h_ref)

    bhh = bhh_ref[...]                      # (1, G), cheap to keep in vregs

    # Keep W_hh resident in registers only when small enough (<= 16 vregs);
    # otherwise let Mosaic stream it from VMEM into the MXU each step
    # (materializing a 48+ vreg RHS across the loop would spill).
    keep_whh_resident = (whh_ref.shape[0] * whh_ref.shape[1] * 4) <= 16 * 4096
    whh_resident = whh_ref[...] if keep_whh_resident else None

    def step_gh(h):
        rhs = whh_resident if keep_whh_resident else whh_ref[...]
        return jnp.dot(h, rhs, preferred_element_type=jnp.float32) + bhh

    def sub_block(b, h):
        row0 = pl.multiple_of(b * _SUB, _SUB)
        gx_blk = gates_ref[pl.ds(row0, _SUB), :]        # (8, G): one load
        rows = []
        for t in range(_SUB):                           # bounded unroll (8)
            gx = gx_blk[t:t + 1, :]                     # static sublane slice
            gh = step_gh(h)                             # (1, G)
            # Gate k lives at lanes [k*h_w, k*h_w + h_w): static slices, no
            # cross-gate mixing in either layout.
            r = jax.nn.sigmoid(gx[:, 0 * h_w:1 * h_w] + gh[:, 0 * h_w:1 * h_w])
            z = jax.nn.sigmoid(gx[:, 1 * h_w:2 * h_w] + gh[:, 1 * h_w:2 * h_w])
            n = jnp.tanh(gx[:, 2 * h_w:3 * h_w] + r * gh[:, 2 * h_w:3 * h_w])
            h = (1.0 - z) * n + z * h
            rows.append(h)
        # One (8, h_w) store per 8 timesteps.
        out_ref[pl.ds(row0, _SUB), :] = jnp.concatenate(rows, axis=0)
        return h

    h_final = lax.fori_loop(0, chunk // _SUB, sub_block, h_ref[...],
                            unroll=False)
    h_ref[...] = h_final


# --------------------------------------------------------------------------
# Wrapper
# --------------------------------------------------------------------------
def _layout_gate_cols(x, h, h_w, g_total):
    """(..., 3h) -> (..., g_total); gate k at cols [k*h_w, k*h_w + h)."""
    pad_tail = [(0, 0)] * (x.ndim - 1)
    parts = []
    for k in range(3):
        g = x[..., k * h:(k + 1) * h]
        if h_w > h:
            g = jnp.pad(g, pad_tail + [(0, h_w - h)])
        parts.append(g)
    out = jnp.concatenate(parts, axis=-1)               # (..., 3*h_w)
    if g_total > 3 * h_w:
        out = jnp.pad(out, pad_tail + [(0, g_total - 3 * h_w)])
    return out


def _choose_chunk(seq_len, num_feat, g_total, h_w, budget_bytes):
    """Largest chunk (multiple of 8, <=1024) fitting the VMEM byte budget."""
    per_row = 2 * (g_total + h_w + num_feat) * 4        # double-buffered blocks
    fixed = 2 * (h_w + num_feat + 2) * g_total * 4 + 64 * 1024
    avail = max(budget_bytes - fixed, _SUB * per_row)
    max_rows = max(_SUB, (avail // per_row) // _SUB * _SUB)
    chunk = min(_round_up(seq_len, _SUB), max_rows, 1024)
    return max(_SUB, (chunk // _SUB) * _SUB)


def phonology_encoder_forward(inp, params):
    """inp: (seq_len, input_size) f32. Returns (output, hidden) with PyTorch
    shapes (seq_len, 1, hidden_size) and (1, 1, hidden_size)."""
    seq_len, num_feat = inp.shape
    hidden_size = params["whh_t"].shape[0]

    # Gate layout: one packed 128-lane group when all three gates fit in it,
    # otherwise one 128-lane-aligned group per gate.
    packed = 3 * hidden_size <= 128
    h_w = hidden_size if packed else _round_up(hidden_size, 128)
    g_total = _round_up(3 * h_w, 128)

    # Weight prep (one-time, XLA): fold the embedding matmul into W_ih
    # (exact reassociation) and lay out gate columns.
    w_fused = jnp.dot(params["embedding"], params["wih_t"],
                      preferred_element_type=jnp.float32)               # (F, 3H)
    w_fused_l = _layout_gate_cols(w_fused, hidden_size, h_w, g_total)   # (F, G)
    bih_l = _layout_gate_cols(params["bih"], hidden_size, h_w, g_total)
    whh_l = _layout_gate_cols(params["whh_t"], hidden_size, h_w, g_total)
    if h_w > hidden_size:
        whh_l = jnp.pad(whh_l, ((0, h_w - hidden_size), (0, 0)))        # (h_w, G)
    bhh_l = _layout_gate_cols(params["bhh"], hidden_size, h_w, g_total)

    chunk_eff = _choose_chunk(seq_len, num_feat, g_total, h_w, _VMEM_BUDGET)
    num_chunks = pl.cdiv(seq_len, chunk_eff)
    s_total = num_chunks * chunk_eff
    inp_p = jnp.pad(inp.astype(jnp.float32), ((0, s_total - seq_len), (0, 0)))

    # ---- Phase 1: gates_x = inp @ W_fused + b_ih, parallel over chunks ----
    gates = pl.pallas_call(
        _input_proj_kernel,
        grid=(num_chunks,),
        out_shape=jax.ShapeDtypeStruct((s_total, g_total), jnp.float32),
        in_specs=[
            pl.BlockSpec((chunk_eff, num_feat), lambda i: (i, 0)),
            pl.BlockSpec((num_feat, g_total), lambda i: (0, 0)),
            pl.BlockSpec((1, g_total), lambda i: (0, 0)),
        ],
        out_specs=pl.BlockSpec((chunk_eff, g_total), lambda i: (i, 0)),
        compiler_params=pltpu.CompilerParams(
            dimension_semantics=("parallel",),      # both TCs on v7x
            vmem_limit_bytes=_VMEM_LIMIT,
        ),
    )(inp_p, w_fused_l, bih_l)

    # ---- Phase 2: sequential recurrence, gates streamed per chunk ----
    kernel = functools.partial(_gru_recurrence_kernel, h_w=h_w, chunk=chunk_eff)
    out = pl.pallas_call(
        kernel,
        grid=(num_chunks,),
        out_shape=jax.ShapeDtypeStruct((s_total, h_w), jnp.float32),
        in_specs=[
            pl.BlockSpec((chunk_eff, g_total), lambda i: (i, 0)),
            pl.BlockSpec((h_w, g_total), lambda i: (0, 0)),
            pl.BlockSpec((1, g_total), lambda i: (0, 0)),
        ],
        out_specs=pl.BlockSpec((chunk_eff, h_w), lambda i: (i, 0)),
        scratch_shapes=[pltpu.VMEM((1, h_w), jnp.float32)],   # carried hidden
        compiler_params=pltpu.CompilerParams(
            # The h carry is serial across chunks: must stay "arbitrary".
            dimension_semantics=("arbitrary",),
            vmem_limit_bytes=_VMEM_LIMIT,
        ),
    )(gates, whh_l, bhh_l)

    out = out[:seq_len, :hidden_size]
    # hidden is exactly the last GRU output row.
    return (out.reshape(seq_len, 1, hidden_size),
            out[seq_len - 1].reshape(1, 1, hidden_size))


def init_params(key, input_size, embedding_size, hidden_size):
    """Deterministic synthetic init mirroring the PyTorch module's shapes."""
    k_emb, k_wih, k_whh, k_bih, k_bhh = jax.random.split(key, 5)
    bound = 1.0 / jnp.sqrt(hidden_size)
    return {
        # nn.Parameter(FloatTensor(input_size, embedding_size).normal_())
        "embedding": jax.random.normal(k_emb, (input_size, embedding_size),
                                       jnp.float32),
        # nn.GRU(embedding_size, hidden_size): weight_ih_l0 (3H, E) -> transposed
        "wih_t": jax.random.uniform(k_wih, (embedding_size, 3 * hidden_size),
                                    jnp.float32, -bound, bound),
        "whh_t": jax.random.uniform(k_whh, (hidden_size, 3 * hidden_size),
                                    jnp.float32, -bound, bound),
        "bih": jax.random.uniform(k_bih, (1, 3 * hidden_size),
                                  jnp.float32, -bound, bound),
        "bhh": jax.random.uniform(k_bhh, (1, 3 * hidden_size),
                                  jnp.float32, -bound, bound),
    }


def _reference_forward(inp, params):
    """Pure-JAX reference of the PyTorch forward (unfused, unpadded)."""
    H = params["whh_t"].shape[0]
    embedded = inp @ params["embedding"]
    gates_x = embedded @ params["wih_t"] + params["bih"]
    h = jnp.zeros((1, H), jnp.float32)
    outs = []
    for t in range(inp.shape[0]):
        gx = gates_x[t:t + 1]
        gh = h @ params["whh_t"] + params["bhh"]
        r = jax.nn.sigmoid(gx[:, 0 * H:1 * H] + gh[:, 0 * H:1 * H])
        z = jax.nn.sigmoid(gx[:, 1 * H:2 * H] + gh[:, 1 * H:2 * H])
        n = jnp.tanh(gx[:, 2 * H:3 * H] + r * gh[:, 2 * H:3 * H])
        h = (1.0 - z) * n + z * h
        outs.append(h)
    return jnp.stack(outs, axis=0), h.reshape(1, 1, H)


# TODO(synk): concat_phone=True (phone nn.Embedding lookup + concat) and
# bidirectional=True GRU paths are not implemented; default forward path only.
# TODO(synk): explicit MXU staging (pltpu.matmul_push_rhs/acc_lhs/pop) could
# further cut per-step latency for H >= 128; not adopted here for robustness.

if __name__ == "__main__":
    seq_len = 8        # seq_len
    input_size = 16    # num_features
    embedding_size = 32
    hidden_size = 32

    key = jax.random.PRNGKey(0)
    k_params, k_inp = jax.random.split(key)

    params = init_params(k_params, input_size, embedding_size, hidden_size)
    inp = jax.random.normal(k_inp, (seq_len, input_size), jnp.float32)

    output, hidden = phonology_encoder_forward(inp, params)
    jax.block_until_ready((output, hidden))

    assert output.shape == (seq_len, 1, hidden_size)
    assert hidden.shape == (1, 1, hidden_size)

    ref_out, ref_hidden = _reference_forward(inp, params)
    assert float(jnp.max(jnp.abs(output - ref_out))) < 2e-3
    assert float(jnp.max(jnp.abs(hidden - ref_hidden))) < 2e-3

    print("KERNEL_OK")
</pallas_src>

<mosaic_0001>
module attributes {stable_mosaic.version = 11 : i64} {
  func.func @_input_proj_kernel(%arg0: i32, %arg1: memref<8x16xf32, #tpu.memory_space<vmem>>, %arg2: memref<16x128xf32, #tpu.memory_space<vmem>>, %arg3: memref<1x128xf32, #tpu.memory_space<vmem>>, %arg4: memref<8x128xf32, #tpu.memory_space<vmem>>) attributes {dimension_semantics = [#tpu.dimension_semantics<parallel>], iteration_bounds = array<i64: 1>, scalar_prefetch = 0 : i64, scratch_operands = 0 : i64, tpu.core_type = #tpu.core_type<tc>, window_params = [{transform_indices = @transform_0, window_bounds = array<i64: 8, 16>}, {pipeline_mode = #tpu.pipeline_mode<synchronous>, transform_indices = @transform_1, window_bounds = array<i64: 16, 128>}, {pipeline_mode = #tpu.pipeline_mode<synchronous>, transform_indices = @transform_2, window_bounds = array<i64: 1, 128>}, {transform_indices = @transform_3, window_bounds = array<i64: 8, 128>}]} {
    %c0 = arith.constant 0 : index
    %c0_0 = arith.constant 0 : index
    %0 = vector.load %arg1[%c0, %c0_0] : memref<8x16xf32, #tpu.memory_space<vmem>>, vector<8x16xf32>
    %c0_1 = arith.constant 0 : index
    %c0_2 = arith.constant 0 : index
    %1 = vector.load %arg2[%c0_1, %c0_2] : memref<16x128xf32, #tpu.memory_space<vmem>>, vector<16x128xf32>
    %cst = arith.constant dense<0.000000e+00> : vector<8x128xf32>
    %2 = tpu.matmul %0, %1, %cst {dimension_numbers = #tpu.dot_dimension_numbers<[1], [0], [0], [1], [0, 0, 1, 1], [], []>} : vector<8x16xf32>, vector<16x128xf32>, vector<8x128xf32> -> vector<8x128xf32>
    %c0_3 = arith.constant 0 : index
    %c0_4 = arith.constant 0 : index
    %3 = vector.load %arg3[%c0_3, %c0_4] : memref<1x128xf32, #tpu.memory_space<vmem>>, vector<1x128xf32>
    %4 = vector.broadcast %3 : vector<1x128xf32> to vector<8x128xf32>
    %5 = arith.addf %2, %4 : vector<8x128xf32>
    %c0_5 = arith.constant 0 : index
    %c0_6 = arith.constant 0 : index
    %6 = vector.load %arg4[%c0_5, %c0_6] : memref<8x128xf32, #tpu.memory_space<vmem>>, vector<8x128xf32>
    tpu.vector_store %arg4[%c0_5, %c0_6], %5 {strides = array<i32>} : memref<8x128xf32, #tpu.memory_space<vmem>>, vector<8x128xf32>,
    return
  }
  func.func @transform_0(%arg0: i32) -> (i32, i32) {
    %c0_i32 = arith.constant 0 : i32
    %c0_i32_0 = arith.constant 0 : i32
    return %arg0, %c0_i32 : i32, i32
  }
  func.func @transform_1(%arg0: i32) -> (i32, i32) {
    %c0_i32 = arith.constant 0 : i32
    %c0_i32_0 = arith.constant 0 : i32
    %c0_i32_1 = arith.constant 0 : i32
    return %c0_i32, %c0_i32_0 : i32, i32
  }
  func.func @transform_2(%arg0: i32) -> (i32, i32) {
    %c0_i32 = arith.constant 0 : i32
    %c0_i32_0 = arith.constant 0 : i32
    %c0_i32_1 = arith.constant 0 : i32
    return %c0_i32, %c0_i32_0 : i32, i32
  }
  func.func @transform_3(%arg0: i32) -> (i32, i32) {
    %c0_i32 = arith.constant 0 : i32
    %c0_i32_0 = arith.constant 0 : i32
    return %arg0, %c0_i32 : i32, i32
  }
}

</mosaic_0001>

<llo_original>
// kernel: tpu_custom_call.1
$region0: #{tpu_custom_call.1}
  #allocation0 [shape = 'u32[]', space=smem, size = 0x4, offset = 0x4, fixed_abs, tag = 'smem constant byte address 0x4 - core index']
  #allocation1 [shape = 'u32[144,128]{1,0:T(1,128)}', space=vmem, size = 0x12000, scoped, tag = 'internal scratch']
  %s0 = inlined_call_operand.hbm [shape: f32[8,16], index: 0, kind: input, shape index: {}]
  %s1 = inlined_call_operand.hbm [shape: f32[16,128], index: 1, kind: input, shape index: {}]
  %s2 = inlined_call_operand.vmem [shape: f32[1,128], index: 2, kind: input, shape index: {}]
  %s3 = inlined_call_operand.hbm [shape: f32[8,128], index: 3, kind: output, shape index: {}]
  %s4 = sld [smem:[#allocation0]]
  $region30: #{tpu_custom_call.1} parent=0
    _
  %s6 = ssub.s32 1, %s4
  %s7 = scalar_select 0, %s6, %s4
  $region1: #{tpu_custom_call.1} parent=0
    #allocation2 [shape = 'u8[4096]{0}', space=vmem, size = 0x1000, scoped, tag = 'input window, operand 0, single buffered']
    #allocation3 [shape = 's32[1]{0}', space=sflag, size = 0x4, scoped, tag = 'scoped memory for tpu_custom_call.1']
    #allocation4 [shape = 's32[1]{0}', space=sflag, size = 0x4, scoped, tag = 'scoped memory for tpu_custom_call.1']
    #allocation5 [shape = 'u8[8192]{0}', space=vmem, size = 0x2000, scoped, tag = 'input window, operand 1, single buffered']
    #allocation6 [shape = 's32[1]{0}', space=sflag, size = 0x4, scoped, tag = 'scoped memory for tpu_custom_call.1']
    #allocation7 [shape = 'u8[4096]{0}', space=vmem, size = 0x1000, scoped, tag = 'output window, operand 0, single buffered']
    %8 = vsyncpa [#allocation3], 0
    %9 = vsyncpa [#allocation6], 0
    %10 = vsyncpa [#allocation4], 0
    // Predicated region
    $region2: #{tpu_custom_call.1} parent=1 // pred_check
      _
    $region3: #{tpu_custom_call.1} parent=1 // pred_check_branch
      %12 = sbr.rel (0) target = $region5
    $region4: #{tpu_custom_call.1} parent=1 // pred_region
      %s14 = ssub.s32 128, 128
      %15 = vsyncadd [#allocation3], %s14
      %s17 = sshll.u32 [#allocation2], 4
      %s18 = int_to_ptr.vmem [resolvable:$true] %s17
      %20 = dma.hbm_to_vmem [thread:$0]  %s0, 128, %s18, [#allocation3]
    $region5: #{tpu_custom_call.1} parent=1 // pred_fallthru
      _
    // Predicated region
    $region6: #{tpu_custom_call.1} parent=1 // pred_check
      _
    $region7: #{tpu_custom_call.1} parent=1 // pred_check_branch
      %22 = sbr.rel (0) target = $region9
    $region8: #{tpu_custom_call.1} parent=1 // pred_region
      %s24 = ssub.s32 256, 256
      %25 = vsyncadd [#allocation6], %s24
      %s26 = sshll.u32 [#allocation5], 4
      %s27 = int_to_ptr.vmem [resolvable:$true] %s26
      %32 = dma.hbm_to_vmem [thread:$0]  %s1, 256, %s27, [#allocation6], 128, 128, 8
    $region9: #{tpu_custom_call.1} parent=1 // pred_fallthru
      _
    // Predicated region
    $region10: #{tpu_custom_call.1} parent=1 // pred_check
      _
    $region11: #{tpu_custom_call.1} parent=1 // pred_check_branch
      %34 = sbr.rel (0) target = $region13
    $region12: #{tpu_custom_call.1} parent=1 // pred_region
      _
    $region13: #{tpu_custom_call.1} parent=1 // pred_fallthru
      _
    // Predicated region
    $region14: #{tpu_custom_call.1} parent=1 // pred_check
      _
    $region15: #{tpu_custom_call.1} parent=1 // pred_check_branch
      %36 = sbr.rel (0) target = $region17
    $region16: #{tpu_custom_call.1} parent=1 // pred_region
      %37 = dma.done [#allocation3], 128
    $region17: #{tpu_custom_call.1} parent=1 // pred_fallthru
      _
    // Predicated region
    $region18: #{tpu_custom_call.1} parent=1 // pred_check
      _
    $region19: #{tpu_custom_call.1} parent=1 // pred_check_branch
      %39 = sbr.rel (0) target = $region21
    $region20: #{tpu_custom_call.1} parent=1 // pred_region
      %40 = dma.done [#allocation6], 256
    $region21: #{tpu_custom_call.1} parent=1 // pred_fallthru
      _
    %v41 = vld [vmem:[#allocation2] sm:$0xff]
    %v42 = vld [vmem:[#allocation5] sm:$0xff]
    %v43 = vld [vmem:[#allocation5 + $0x8] sm:$0xff]
    %v44 = vld [vmem:[%s2] sm:$0x1]
    %v46 = vlaneseq
    %v47 = vshrl.u32 %v46, 7
    %v48 = vsub.s32 0, %v47
    %v49 = vrot.slane %v44, %v48
    %vm51 = vcmask 130048
    %v53 = vsel %vm51, %v41, 0
    %55 = vmatprep.subr.mxu0 0.0
    %56 = vmatpush1.msra.mxu0 %v42
    %57 = vmatprep.subr.mxu0 0.0
    %58 = vmatpush1.msra.mxu0 %v43
    %59 = vmatprep.subr.mxu0 0.0
    %60 = vmatpush1.msra.mxu0 0.0
    %61 = vmatprep.subr.mxu0 0.0
    %62 = vmatpush1.msra.mxu0 0.0
    %63 = vmatprep.subr.mxu0 0.0
    %64 = vmatpush1.msra.mxu0 0.0
    %65 = vmatprep.subr.mxu0 0.0
    %66 = vmatpush1.msra.mxu0 0.0
    %67 = vmatprep.subr.mxu0 0.0
    %68 = vmatpush1.msra.mxu0 0.0
    %69 = vmatprep.subr.mxu0 0.0
    %70 = vmatpush1.msra.mxu0 0.0
    %71 = vmatprep.subr.mxu0 0.0
    %72 = vmatpush1.msra.mxu0 0.0
    %73 = vmatprep.subr.mxu0 0.0
    %74 = vmatpush1.msra.mxu0 0.0
    %75 = vmatprep.subr.mxu0 0.0
    %76 = vmatpush1.msra.mxu0 0.0
    %77 = vmatprep.subr.mxu0 0.0
    %78 = vmatpush1.msra.mxu0 0.0
    %79 = vmatprep.subr.mxu0 0.0
    %80 = vmatpush1.msra.mxu0 0.0
    %81 = vmatprep.subr.mxu0 0.0
    %82 = vmatpush1.msra.mxu0 0.0
    %83 = vmatprep.subr.mxu0 0.0
    %84 = vmatpush1.msra.mxu0 0.0
    %85 = vmatprep.subr.mxu0 0.0
    %86 = vmatpush1.msra.mxu0 0.0
    %87 = vmatprep.subr.mxu0 0.0
    %88 = vmatpush1.msra.mxu0 0.0
    %89 = vmatprep.subr.mxu0 0.0
    %90 = vmatpush1.msra.mxu0 0.0
    %91 = vmatprep.subr.mxu0 0.0
    %92 = vmatpush1.msra.mxu0 0.0
    %93 = vmatprep.subr.mxu0 0.0
    %94 = vmatpush1.msra.mxu0 0.0
    %95 = vmatprep.subr.mxu0 0.0
    %96 = vmatpush1.msra.mxu0 0.0
    %97 = vmatprep.subr.mxu0 0.0
    %98 = vmatpush1.msra.mxu0 0.0
    %99 = vmatprep.subr.mxu0 0.0
    %100 = vmatpush1.msra.mxu0 0.0
    %101 = vmatprep.subr.mxu0 0.0
    %102 = vmatpush1.msra.mxu0 0.0
    %103 = vmatprep.subr.mxu0 0.0
    %104 = vmatpush1.msra.mxu0 0.0
    %105 = vmatprep.subr.mxu0 0.0
    %106 = vmatpush1.msra.mxu0 0.0
    %107 = vmatprep.subr.mxu0 0.0
    %108 = vmatpush1.msra.mxu0 0.0
    %109 = vmatprep.subr.mxu0 0.0
    %110 = vmatpush1.msra.mxu0 0.0
    %111 = vmatprep.subr.mxu0 0.0
    %112 = vmatpush1.msra.mxu0 0.0
    %113 = vmatprep.subr.mxu0 0.0
    %114 = vmatpush1.msra.mxu0 0.0
    %115 = vmatprep.subr.mxu0 0.0
    %116 = vmatpush1.msra.mxu0 0.0
    %117 = vmatprep.subr.mxu0 0.0
    %118 = vmatpush1.msra.mxu0 0.0
    %119 = vmatprep.mubr.f32.mxu0 0.0
    %120 = vmatmul.mubr.f32.gmra.mrb[0].mxu0 %v53
    %v121 = vpop.f32.mrb[0].mxu0
    %v122 = vadd.f32 %v49, %v121
    %v123 = vpop.f32.mrb[0].mxu0
    %124 = vdwg.mxu0
    %125 = vst [vmem:[#allocation7] sm:$0xff] %v122
    // Predicated region
    $region22: #{tpu_custom_call.1} parent=1 // pred_check
      _
    $region23: #{tpu_custom_call.1} parent=1 // pred_check_branch
      %127 = sbr.rel (0) target = $region25
    $region24: #{tpu_custom_call.1} parent=1 // pred_region
      %s129 = ssub.s32 128, 128
      %130 = vsyncadd [#allocation4], %s129
      %s132 = sshll.u32 [#allocation7], 4
      %s133 = int_to_ptr.vmem [resolvable:$true] %s132
      %135 = dma.vmem_to_hbm [thread:$0]  %s133, 128, %s3, [#allocation4]
    $region25: #{tpu_custom_call.1} parent=1 // pred_fallthru
      _
    // Predicated region
    $region26: #{tpu_custom_call.1} parent=1 // pred_check
      _
    $region27: #{tpu_custom_call.1} parent=1 // pred_check_branch
      %137 = sbr.rel (0) target = $region29
    $region28: #{tpu_custom_call.1} parent=1 // pred_region
      %138 = dma.done [#allocation4], 128
    $region29: #{tpu_custom_call.1} parent=1 // pred_fallthru
      _
    %139 = vsyncpa [#allocation3], 1
    %140 = vsyncpa [#allocation6], 1
    %141 = vsyncpa [#allocation4], 1

</llo_original>
